<compile_context>
chip_gen: v5e
topology: v5e:2x2
jax: 0.10.0
libtpu: 0.0.40
codegen_flags: <defaults>
</compile_context>

<pallas_src>
import jax
import jax.numpy as jnp
from jax.experimental import pallas as pl
from jax.experimental.pallas import tpu as pltpu

LANE = 128       # lane width: last-dim padding granule
SUBLANE = 16     # bf16 sublane packing granule (also covers f32's 8)
_MiB = 1024 * 1024


def _cdiv(a, b):
    return -(-a // b)


def _round_up(n, m):
    return _cdiv(n, m) * m


def _pad2d(a, rows, cols):
    return jnp.pad(a, ((0, rows - a.shape[0]), (0, cols - a.shape[1])))


# ----------------------------------------------------------------------------
# Kernel
# ----------------------------------------------------------------------------
def cond_gaussian_kernel(x_ref, wnet_ref, bnet_ref, whead_ref, bhead_ref,
                         out_ref, acc_ref):
    """Grid = (batch_tiles, hidden_tiles); hidden axis is the reduction.

    Per (i, k): h_k = relu(x_i @ Wnet[:, k·tkh:] + bnet[k·tkh:])   (MXU + VPU)
                acc_i += h_k @ [Wmu || Wlv][k·tkh:, :]             (MXU, f32 acc)
    Finalize on the last hidden tile with the fused bias and one wide,
    lane-dense store of [mu || logvar].  With a single hidden tile this
    degenerates to the fully fused two-matmul kernel.
    """
    k = pl.program_id(1)

    @pl.when(k == 0)
    def _():
        acc_ref[...] = jnp.zeros_like(acc_ref)

    # First layer slice: bf16 (or f32) MXU matmul, f32 accumulation,
    # f32 bias + ReLU epilogue on the VPU.
    h = jnp.dot(x_ref[...], wnet_ref[...], preferred_element_type=jnp.float32)
    h = jnp.maximum(h + bnet_ref[...], 0.0)

    # Fused mu/logvar head slice, accumulated into resident f32 scratch.
    acc_ref[...] += jnp.dot(h.astype(whead_ref.dtype), whead_ref[...],
                            preferred_element_type=jnp.float32)

    @pl.when(k == pl.num_programs(1) - 1)
    def _():
        out_ref[...] = (acc_ref[...] + bhead_ref[...]).astype(out_ref.dtype)


# ----------------------------------------------------------------------------
# One-time (init-time) parameter packing -- hoisted off the per-call hot path
# ----------------------------------------------------------------------------
def prepare_params(params, *, compute_dtype=jnp.bfloat16,
                   max_batch_tile=512, max_hidden_tile=2048,
                   weight_block_budget_bytes=8 * _MiB):
    """Fuse mu/logvar heads, pad feature axes to lane-dense multiples of 128,
    cast weights to the MXU compute dtype, and choose the hidden (K) tiling.

    params = (W_net, b_net, W_mu, b_mu, W_logvar, b_logvar), W as
    (in_features, out_features) (PyTorch Linear weight pre-transposed),
    b as (1, out_features).  Zero padding is exact: padded inputs/weights
    contribute 0, relu(0) = 0, padded output columns are sliced off.
    """
    wnet, bnet, wmu, bmu, wlv, blv = params
    in_dim, hidden = wnet.shape
    latent = wmu.shape[1]

    in_p = _round_up(in_dim, LANE)
    out_p = _round_up(2 * latent, LANE)
    hid_p = _round_up(hidden, LANE)

    # Hidden (K) tile: resident when small; streamed through a K grid axis when
    # the weight slabs would crowd VMEM (v7x has only 64 MiB per TensorCore).
    wbytes = jnp.dtype(compute_dtype).itemsize
    tkh_cap = (weight_block_budget_bytes // (wbytes * (in_p + out_p))) // LANE * LANE
    tkh = max(LANE, min(hid_p, max_hidden_tile, tkh_cap))
    nk = _cdiv(hid_p, tkh)
    hid_pad = nk * tkh

    whead = jnp.concatenate([wmu, wlv], axis=1)          # (hidden, 2*latent)
    bhead = jnp.concatenate([bmu, blv], axis=1)          # (1, 2*latent)

    return {
        'wnet': _pad2d(wnet, in_p, hid_pad).astype(compute_dtype),
        'bnet': _pad2d(bnet, 1, hid_pad).astype(jnp.float32),   # biases stay f32 (VPU)
        'whead': _pad2d(whead, hid_pad, out_p).astype(compute_dtype),
        'bhead': _pad2d(bhead, 1, out_p).astype(jnp.float32),
        # static layout metadata (python ints; keep static if you jit the forward)
        'in_dim': in_dim, 'latent': latent,
        'in_p': in_p, 'out_p': out_p, 'hid_pad': hid_pad, 'tkh': tkh, 'nk': nk,
        'compute_dtype': compute_dtype, 'max_batch_tile': max_batch_tile,
    }


def _batch_tiling(B, max_batch_tile):
    # Pick the tile COUNT first (bounds pad waste to < SUBLANE rows per tile),
    # then guarantee >= 2 tiles whenever B allows so the "parallel" batch axis
    # feeds both TensorCores on v7x (megacore elsewhere).
    nt = _cdiv(B, max_batch_tile)
    if nt < 2 and B >= 2 * SUBLANE:
        nt = 2
    tm = _round_up(_cdiv(B, nt), SUBLANE)
    return nt, tm, nt * tm


def _vmem_limit_bytes(tm, in_p, tkh, out_p, wbytes):
    # Sized from the actual buffers (worst case: everything double-buffered)
    # plus headroom for the f32 `h` intermediate copies / Mosaic scratch.
    need = (
        2 * (in_p * tkh + tkh * out_p) * wbytes   # weight slabs
        + 2 * (tkh + out_p) * 4                   # f32 biases
        + 2 * tm * in_p * wbytes                  # x tile
        + 2 * tm * out_p * 4                      # out tile
        + tm * out_p * 4                          # f32 accumulator scratch
        + tm * tkh * 4                            # f32 h intermediate
    )
    # Never request the whole physical VMEM (v7x: 64 MiB per TC).  Raise the
    # 48 MiB cap for bigger batch tiles on v5e/v6e (128 MiB physical).
    return min(need + 8 * _MiB, 48 * _MiB)


# ----------------------------------------------------------------------------
# Forward (hot path: pad/cast x + one pallas_call)
# ----------------------------------------------------------------------------
def conditional_gaussian_forward(x, packed):
    """Returns {'param:mu': ..., 'param:logvar': ...} like the PyTorch module."""
    B, in_dim = x.shape
    if in_dim != packed['in_dim']:
        raise ValueError("x feature dim does not match prepared params")
    in_p, out_p = packed['in_p'], packed['out_p']
    tkh, nk, hid_pad = packed['tkh'], packed['nk'], packed['hid_pad']
    latent = packed['latent']
    compute_dtype = packed['compute_dtype']
    wbytes = jnp.dtype(compute_dtype).itemsize

    nt, tm, b_pad = _batch_tiling(B, packed['max_batch_tile'])
    x_p = _pad2d(x, b_pad, in_p).astype(compute_dtype)   # only per-call prep

    cost = pl.CostEstimate(
        flops=2 * b_pad * hid_pad * (in_p + out_p),
        transcendentals=0,
        bytes_accessed=(b_pad * in_p * wbytes
                        + (in_p + out_p) * hid_pad * wbytes
                        + (hid_pad + out_p) * 4
                        + b_pad * out_p * 4),
    )

    def run(single_buffer_resident):
        # When nk == 1 the weight/bias blocks never change across the grid ->
        # single-buffer them so the pipeline doesn't double-buffer constants.
        mode = ({'pipeline_mode': pl.Buffered(1)}
                if (single_buffer_resident and nk == 1) else {})
        return pl.pallas_call(
            cond_gaussian_kernel,
            out_shape=jax.ShapeDtypeStruct((b_pad, out_p), jnp.float32),
            grid=(nt, nk),
            in_specs=[
                pl.BlockSpec((tm, in_p), lambda i, k: (i, 0)),            # batch-tiled x
                pl.BlockSpec((in_p, tkh), lambda i, k: (0, k), **mode),   # Wnet K-slab
                pl.BlockSpec((1, tkh), lambda i, k: (0, k), **mode),      # bnet K-slab
                pl.BlockSpec((tkh, out_p), lambda i, k: (k, 0), **mode),  # [Wmu||Wlv] K-slab
                pl.BlockSpec((1, out_p), lambda i, k: (0, 0), **mode),    # [bmu||blv]
            ],
            out_specs=pl.BlockSpec((tm, out_p), lambda i, k: (i, 0)),
            scratch_shapes=[pltpu.VMEM((tm, out_p), jnp.float32)],        # f32 accumulator
            compiler_params=pltpu.CompilerParams(
                # batch across TensorCores; hidden reduction sequential (last)
                dimension_semantics=("parallel", "arbitrary"),
                vmem_limit_bytes=_vmem_limit_bytes(tm, in_p, tkh, out_p, wbytes),
            ),
            cost_estimate=cost,
        )(x_p, packed['wnet'], packed['bnet'], packed['whead'], packed['bhead'])

    if nk == 1:
        try:
            out = run(True)
        except Exception:
            # pl.Buffered(1) not supported by this jax/Mosaic build: fall back
            # to default depth-2 pipelining (slightly more VMEM, same result).
            out = run(False)
    else:
        out = run(False)

    # Padded rows/columns are garbage / zeros and are sliced off here.
    # TODO(synk): optionally return the padded slab (or bf16) to skip these
    # slice copies when downstream tolerates it.
    mu = out[:B, :latent]
    logvar = out[:B, latent:2 * latent]
    return {'param:mu': mu, 'param:logvar': logvar}


# ----------------------------------------------------------------------------
# Demo / self-test
# ----------------------------------------------------------------------------
def init_params(key, in_dim, hidden, latent):
    """Deterministic synthetic parameters (PyTorch-Linear-like uniform init)."""
    ks = jax.random.split(key, 6)

    def lin(kw, kb, fan_in, fan_out):
        bound = 1.0 / jnp.sqrt(fan_in)
        w = jax.random.uniform(kw, (fan_in, fan_out), jnp.float32, -bound, bound)
        b = jax.random.uniform(kb, (1, fan_out), jnp.float32, -bound, bound)
        return w, b

    wnet, bnet = lin(ks[0], ks[1], in_dim, hidden)
    wmu, bmu = lin(ks[2], ks[3], hidden, latent)
    wlv, blv = lin(ks[4], ks[5], hidden, latent)
    return (wnet, bnet, wmu, bmu, wlv, blv)


def reference_forward(x, params):
    wnet, bnet, wmu, bmu, wlv, blv = params
    h = jnp.maximum(x @ wnet + bnet, 0.0)
    return {'param:mu': h @ wmu + bmu, 'param:logvar': h @ wlv + blv}


if __name__ == "__main__":
    key = jax.random.PRNGKey(0)
    kx, kp = jax.random.split(key)

    # --- Test 1: default bf16 compute, resident weights, 2-tile batch grid ---
    B, in_dim, hidden, latent = 32, 32, 64, 16
    x = jax.random.normal(kx, (B, in_dim), jnp.float32)
    params = init_params(kp, in_dim, hidden, latent)
    ref = reference_forward(x, params)

    packed = prepare_params(params)                     # one-time weight prep
    out = conditional_gaussian_forward(x, packed)
    jax.block_until_ready(out)
    assert out['param:mu'].shape == (B, latent)
    assert out['param:logvar'].shape == (B, latent)
    # bf16 MXU inputs with f32 accumulation: loosened tolerance vs f32 reference.
    assert jnp.allclose(out['param:mu'], ref['param:mu'], atol=3e-2, rtol=3e-2)
    assert jnp.allclose(out['param:logvar'], ref['param:logvar'], atol=3e-2, rtol=3e-2)

    # --- Test 2: f32 compute fallback + forced hidden K-tiling (nk=2 path) ---
    B2, in2, hidden2, latent2 = 32, 32, 256, 16
    x2 = jax.random.normal(jax.random.fold_in(kx, 1), (B2, in2), jnp.float32)
    params2 = init_params(jax.random.fold_in(kp, 1), in2, hidden2, latent2)
    ref2 = reference_forward(x2, params2)

    packed2 = prepare_params(params2, compute_dtype=jnp.float32, max_hidden_tile=128)
    assert packed2['nk'] == 2                           # exercises the accumulator path
    out2 = conditional_gaussian_forward(x2, packed2)
    jax.block_until_ready(out2)
    assert jnp.allclose(out2['param:mu'], ref2['param:mu'], atol=1e-2, rtol=1e-2)
    assert jnp.allclose(out2['param:logvar'], ref2['param:logvar'], atol=1e-2, rtol=1e-2)

    # TODO(synk): sample() / kl_divergence() / mean() static helpers live outside
    # forward(); only the forward hot path is implemented as a Pallas kernel.
    print("KERNEL_OK")
</pallas_src>

<mosaic_0001>
module attributes {stable_mosaic.version = 11 : i64} {
  func.func @cond_gaussian_kernel(%arg0: i32, %arg1: i32, %arg2: memref<16x128xbf16, #tpu.memory_space<vmem>>, %arg3: memref<128x128xbf16, #tpu.memory_space<vmem>>, %arg4: memref<1x128xf32, #tpu.memory_space<vmem>>, %arg5: memref<128x128xbf16, #tpu.memory_space<vmem>>, %arg6: memref<1x128xf32, #tpu.memory_space<vmem>>, %arg7: memref<16x128xf32, #tpu.memory_space<vmem>>, %arg8: memref<16x128xf32, #tpu.memory_space<vmem>>) attributes {dimension_semantics = [#tpu.dimension_semantics<parallel>, #tpu.dimension_semantics<arbitrary>], iteration_bounds = array<i64: 2, 1>, scalar_prefetch = 0 : i64, scratch_operands = 1 : i64, tpu.core_type = #tpu.core_type<tc>, window_params = [{transform_indices = @transform_0, window_bounds = array<i64: 16, 128>}, {pipeline_mode = #tpu.pipeline_mode<synchronous>, transform_indices = @transform_1, window_bounds = array<i64: 128, 128>}, {pipeline_mode = #tpu.pipeline_mode<synchronous>, transform_indices = @transform_2, window_bounds = array<i64: 1, 128>}, {pipeline_mode = #tpu.pipeline_mode<synchronous>, transform_indices = @transform_3, window_bounds = array<i64: 128, 128>}, {pipeline_mode = #tpu.pipeline_mode<synchronous>, transform_indices = @transform_4, window_bounds = array<i64: 1, 128>}, {transform_indices = @transform_5, window_bounds = array<i64: 16, 128>}]} {
    %c0_i32 = arith.constant 0 : i32
    %0 = arith.cmpi eq, %arg1, %c0_i32 : i32
    %1 = arith.extui %0 : i1 to i32
    %c0_i32_0 = arith.constant 0 : i32
    %2 = arith.cmpi ne, %1, %c0_i32_0 : i32
    scf.if %2 {
      %cst_16 = arith.constant 0.000000e+00 : f32
      %20 = vector.broadcast %cst_16 : f32 to vector<16x128xf32>
      %c0_17 = arith.constant 0 : index
      %c0_18 = arith.constant 0 : index
      %21 = vector.load %arg8[%c0_17, %c0_18] : memref<16x128xf32, #tpu.memory_space<vmem>>, vector<16x128xf32>
      tpu.vector_store %arg8[%c0_17, %c0_18], %20 {strides = array<i32>} : memref<16x128xf32, #tpu.memory_space<vmem>>, vector<16x128xf32>,
    } else {
    }
    %c0 = arith.constant 0 : index
    %c0_1 = arith.constant 0 : index
    %3 = vector.load %arg2[%c0, %c0_1] : memref<16x128xbf16, #tpu.memory_space<vmem>>, vector<16x128xbf16>
    %c0_2 = arith.constant 0 : index
    %c0_3 = arith.constant 0 : index
    %4 = vector.load %arg3[%c0_2, %c0_3] : memref<128x128xbf16, #tpu.memory_space<vmem>>, vector<128x128xbf16>
    %cst = arith.constant dense<0.000000e+00> : vector<16x128xf32>
    %5 = tpu.matmul %3, %4, %cst {dimension_numbers = #tpu.dot_dimension_numbers<[1], [0], [0], [1], [0, 0, 1, 1], [], []>} : vector<16x128xbf16>, vector<128x128xbf16>, vector<16x128xf32> -> vector<16x128xf32>
    %c0_4 = arith.constant 0 : index
    %c0_5 = arith.constant 0 : index
    %6 = vector.load %arg4[%c0_4, %c0_5] : memref<1x128xf32, #tpu.memory_space<vmem>>, vector<1x128xf32>
    %7 = vector.broadcast %6 : vector<1x128xf32> to vector<16x128xf32>
    %8 = arith.addf %5, %7 : vector<16x128xf32>
    %cst_6 = arith.constant 0.000000e+00 : f32
    %9 = vector.broadcast %cst_6 : f32 to vector<16x128xf32>
    %10 = arith.maximumf %8, %9 : vector<16x128xf32>
    %c0_7 = arith.constant 0 : index
    %c0_8 = arith.constant 0 : index
    %11 = vector.load %arg8[%c0_7, %c0_8] : memref<16x128xf32, #tpu.memory_space<vmem>>, vector<16x128xf32>
    %12 = arith.truncf %10 : vector<16x128xf32> to vector<16x128xbf16>
    %c0_9 = arith.constant 0 : index
    %c0_10 = arith.constant 0 : index
    %13 = vector.load %arg5[%c0_9, %c0_10] : memref<128x128xbf16, #tpu.memory_space<vmem>>, vector<128x128xbf16>
    %cst_11 = arith.constant dense<0.000000e+00> : vector<16x128xf32>
    %14 = tpu.matmul %12, %13, %cst_11 {dimension_numbers = #tpu.dot_dimension_numbers<[1], [0], [0], [1], [0, 0, 1, 1], [], []>} : vector<16x128xbf16>, vector<128x128xbf16>, vector<16x128xf32> -> vector<16x128xf32>
    %15 = arith.addf %11, %14 : vector<16x128xf32>
    %c0_12 = arith.constant 0 : index
    %c0_13 = arith.constant 0 : index
    %16 = vector.load %arg8[%c0_12, %c0_13] : memref<16x128xf32, #tpu.memory_space<vmem>>, vector<16x128xf32>
    tpu.vector_store %arg8[%c0_12, %c0_13], %15 {strides = array<i32>} : memref<16x128xf32, #tpu.memory_space<vmem>>, vector<16x128xf32>,
    %c0_i32_14 = arith.constant 0 : i32
    %17 = arith.cmpi eq, %arg1, %c0_i32_14 : i32
    %18 = arith.extui %17 : i1 to i32
    %c0_i32_15 = arith.constant 0 : i32
    %19 = arith.cmpi ne, %18, %c0_i32_15 : i32
    scf.if %19 {
      %c0_16 = arith.constant 0 : index
      %c0_17 = arith.constant 0 : index
      %20 = vector.load %arg8[%c0_16, %c0_17] : memref<16x128xf32, #tpu.memory_space<vmem>>, vector<16x128xf32>
      %c0_18 = arith.constant 0 : index
      %c0_19 = arith.constant 0 : index
      %21 = vector.load %arg6[%c0_18, %c0_19] : memref<1x128xf32, #tpu.memory_space<vmem>>, vector<1x128xf32>
      %22 = vector.broadcast %21 : vector<1x128xf32> to vector<16x128xf32>
      %23 = arith.addf %20, %22 : vector<16x128xf32>
      %c0_20 = arith.constant 0 : index
      %c0_21 = arith.constant 0 : index
      %24 = vector.load %arg7[%c0_20, %c0_21] : memref<16x128xf32, #tpu.memory_space<vmem>>, vector<16x128xf32>
      tpu.vector_store %arg7[%c0_20, %c0_21], %23 {strides = array<i32>} : memref<16x128xf32, #tpu.memory_space<vmem>>, vector<16x128xf32>,
    } else {
    }
    return
  }
  func.func @transform_0(%arg0: i32, %arg1: i32) -> (i32, i32) {
    %c0_i32 = arith.constant 0 : i32
    %c0_i32_0 = arith.constant 0 : i32
    return %arg0, %c0_i32 : i32, i32
  }
  func.func @transform_1(%arg0: i32, %arg1: i32) -> (i32, i32) {
    %c0_i32 = arith.constant 0 : i32
    %c0_i32_0 = arith.constant 0 : i32
    return %c0_i32, %arg1 : i32, i32
  }
  func.func @transform_2(%arg0: i32, %arg1: i32) -> (i32, i32) {
    %c0_i32 = arith.constant 0 : i32
    %c0_i32_0 = arith.constant 0 : i32
    return %c0_i32, %arg1 : i32, i32
  }
  func.func @transform_3(%arg0: i32, %arg1: i32) -> (i32, i32) {
    %c0_i32 = arith.constant 0 : i32
    %c0_i32_0 = arith.constant 0 : i32
    return %arg1, %c0_i32 : i32, i32
  }
  func.func @transform_4(%arg0: i32, %arg1: i32) -> (i32, i32) {
    %c0_i32 = arith.constant 0 : i32
    %c0_i32_0 = arith.constant 0 : i32
    %c0_i32_1 = arith.constant 0 : i32
    return %c0_i32, %c0_i32_0 : i32, i32
  }
  func.func @transform_5(%arg0: i32, %arg1: i32) -> (i32, i32) {
    %c0_i32 = arith.constant 0 : i32
    %c0_i32_0 = arith.constant 0 : i32
    return %arg0, %c0_i32 : i32, i32
  }
}

module attributes {stable_mosaic.version = 11 : i64} {
  func.func @cond_gaussian_kernel(%arg0: i32, %arg1: i32, %arg2: memref<16x128xbf16, #tpu.memory_space<vmem>>, %arg3: memref<128x128xbf16, #tpu.memory_space<vmem>>, %arg4: memref<1x128xf32, #tpu.memory_space<vmem>>, %arg5: memref<128x128xbf16, #tpu.memory_space<vmem>>, %arg6: memref<1x128xf32, #tpu.memory_space<vmem>>, %arg7: memref<16x128xf32, #tpu.memory_space<vmem>>, %arg8: memref<16x128xf32, #tpu.memory_space<vmem>>) attributes {dimension_semantics = [#tpu.dimension_semantics<parallel>, #tpu.dimension_semantics<arbitrary>], iteration_bounds = array<i64: 2, 1>, scalar_prefetch = 0 : i64, scratch_operands = 1 : i64, tpu.core_type = #tpu.core_type<tc>, window_params = [{transform_indices = @transform_0, window_bounds = array<i64: 16, 128>}, {transform_indices = @transform_1, window_bounds = array<i64: 128, 128>}, {transform_indices = @transform_2, window_bounds = array<i64: 1, 128>}, {transform_indices = @transform_3, window_bounds = array<i64: 128, 128>}, {pipeline_mode = #tpu.pipeline_mode<synchronous>, transform_indices = @transform_4, window_bounds = array<i64: 1, 128>}, {transform_indices = @transform_5, window_bounds = array<i64: 16, 128>}]} {
    %c0_i32 = arith.constant 0 : i32
    %0 = arith.cmpi eq, %arg1, %c0_i32 : i32
    %1 = arith.extui %0 : i1 to i32
    %c0_i32_0 = arith.constant 0 : i32
    %2 = arith.cmpi ne, %1, %c0_i32_0 : i32
    scf.if %2 {
      %cst_16 = arith.constant 0.000000e+00 : f32
      %20 = vector.broadcast %cst_16 : f32 to vector<16x128xf32>
      %c0_17 = arith.constant 0 : index
      %c0_18 = arith.constant 0 : index
      %21 = vector.load %arg8[%c0_17, %c0_18] : memref<16x128xf32, #tpu.memory_space<vmem>>, vector<16x128xf32>
      tpu.vector_store %arg8[%c0_17, %c0_18], %20 {strides = array<i32>} : memref<16x128xf32, #tpu.memory_space<vmem>>, vector<16x128xf32>,
    } else {
    }
    %c0 = arith.constant 0 : index
    %c0_1 = arith.constant 0 : index
    %3 = vector.load %arg2[%c0, %c0_1] : memref<16x128xbf16, #tpu.memory_space<vmem>>, vector<16x128xbf16>
    %c0_2 = arith.constant 0 : index
    %c0_3 = arith.constant 0 : index
    %4 = vector.load %arg3[%c0_2, %c0_3] : memref<128x128xbf16, #tpu.memory_space<vmem>>, vector<128x128xbf16>
    %cst = arith.constant dense<0.000000e+00> : vector<16x128xf32>
    %5 = tpu.matmul %3, %4, %cst {dimension_numbers = #tpu.dot_dimension_numbers<[1], [0], [0], [1], [0, 0, 1, 1], [], []>} : vector<16x128xbf16>, vector<128x128xbf16>, vector<16x128xf32> -> vector<16x128xf32>
    %c0_4 = arith.constant 0 : index
    %c0_5 = arith.constant 0 : index
    %6 = vector.load %arg4[%c0_4, %c0_5] : memref<1x128xf32, #tpu.memory_space<vmem>>, vector<1x128xf32>
    %7 = vector.broadcast %6 : vector<1x128xf32> to vector<16x128xf32>
    %8 = arith.addf %5, %7 : vector<16x128xf32>
    %cst_6 = arith.constant 0.000000e+00 : f32
    %9 = vector.broadcast %cst_6 : f32 to vector<16x128xf32>
    %10 = arith.maximumf %8, %9 : vector<16x128xf32>
    %c0_7 = arith.constant 0 : index
    %c0_8 = arith.constant 0 : index
    %11 = vector.load %arg8[%c0_7, %c0_8] : memref<16x128xf32, #tpu.memory_space<vmem>>, vector<16x128xf32>
    %12 = arith.truncf %10 : vector<16x128xf32> to vector<16x128xbf16>
    %c0_9 = arith.constant 0 : index
    %c0_10 = arith.constant 0 : index
    %13 = vector.load %arg5[%c0_9, %c0_10] : memref<128x128xbf16, #tpu.memory_space<vmem>>, vector<128x128xbf16>
    %cst_11 = arith.constant dense<0.000000e+00> : vector<16x128xf32>
    %14 = tpu.matmul %12, %13, %cst_11 {dimension_numbers = #tpu.dot_dimension_numbers<[1], [0], [0], [1], [0, 0, 1, 1], [], []>} : vector<16x128xbf16>, vector<128x128xbf16>, vector<16x128xf32> -> vector<16x128xf32>
    %15 = arith.addf %11, %14 : vector<16x128xf32>
    %c0_12 = arith.constant 0 : index
    %c0_13 = arith.constant 0 : index
    %16 = vector.load %arg8[%c0_12, %c0_13] : memref<16x128xf32, #tpu.memory_space<vmem>>, vector<16x128xf32>
    tpu.vector_store %arg8[%c0_12, %c0_13], %15 {strides = array<i32>} : memref<16x128xf32, #tpu.memory_space<vmem>>, vector<16x128xf32>,
    %c0_i32_14 = arith.constant 0 : i32
    %17 = arith.cmpi eq, %arg1, %c0_i32_14 : i32
    %18 = arith.extui %17 : i1 to i32
    %c0_i32_15 = arith.constant 0 : i32
    %19 = arith.cmpi ne, %18, %c0_i32_15 : i32
    scf.if %19 {
      %c0_16 = arith.constant 0 : index
      %c0_17 = arith.constant 0 : index
      %20 = vector.load %arg8[%c0_16, %c0_17] : memref<16x128xf32, #tpu.memory_space<vmem>>, vector<16x128xf32>
      %c0_18 = arith.constant 0 : index
      %c0_19 = arith.constant 0 : index
      %21 = vector.load %arg6[%c0_18, %c0_19] : memref<1x128xf32, #tpu.memory_space<vmem>>, vector<1x128xf32>
      %22 = vector.broadcast %21 : vector<1x128xf32> to vector<16x128xf32>
      %23 = arith.addf %20, %22 : vector<16x128xf32>
      %c0_20 = arith.constant 0 : index
      %c0_21 = arith.constant 0 : index
      %24 = vector.load %arg7[%c0_20, %c0_21] : memref<16x128xf32, #tpu.memory_space<vmem>>, vector<16x128xf32>
      tpu.vector_store %arg7[%c0_20, %c0_21], %23 {strides = array<i32>} : memref<16x128xf32, #tpu.memory_space<vmem>>, vector<16x128xf32>,
    } else {
    }
    return
  }
  func.func @transform_0(%arg0: i32, %arg1: i32) -> (i32, i32) {
    %c0_i32 = arith.constant 0 : i32
    %c0_i32_0 = arith.constant 0 : i32
    return %arg0, %c0_i32 : i32, i32
  }
  func.func @transform_1(%arg0: i32, %arg1: i32) -> (i32, i32) {
    %c0_i32 = arith.constant 0 : i32
    %c0_i32_0 = arith.constant 0 : i32
    return %c0_i32, %arg1 : i32, i32
  }
  func.func @transform_2(%arg0: i32, %arg1: i32) -> (i32, i32) {
    %c0_i32 = arith.constant 0 : i32
    %c0_i32_0 = arith.constant 0 : i32
    return %c0_i32, %arg1 : i32, i32
  }
  func.func @transform_3(%arg0: i32, %arg1: i32) -> (i32, i32) {
    %c0_i32 = arith.constant 0 : i32
    %c0_i32_0 = arith.constant 0 : i32
    return %arg1, %c0_i32 : i32, i32
  }
  func.func @transform_4(%arg0: i32, %arg1: i32) -> (i32, i32) {
    %c0_i32 = arith.constant 0 : i32
    %c0_i32_0 = arith.constant 0 : i32
    %c0_i32_1 = arith.constant 0 : i32
    return %c0_i32, %c0_i32_0 : i32, i32
  }
  func.func @transform_5(%arg0: i32, %arg1: i32) -> (i32, i32) {
    %c0_i32 = arith.constant 0 : i32
    %c0_i32_0 = arith.constant 0 : i32
    return %arg0, %c0_i32 : i32, i32
  }
}

</mosaic_0001>

<llo_original>
// kernel: tpu_custom_call.1
$region0: #{tpu_custom_call.1}
  #allocation0 [shape = 'u32[]', space=smem, size = 0x4, offset = 0x4, fixed_abs, tag = 'smem constant byte address 0x4 - core index']
  #allocation1 [shape = 'u32[72,128]{1,0:T(1,128)}', space=vmem, size = 0x9000, scoped, tag = 'internal scratch']
  #allocation2 [shape = 'f32[16,128]{1,0:T(8,128)}', space=vmem, size = 0x2000, scoped, tag = 'scratch operand']
  %s0 = inlined_call_operand.hbm [shape: bf16[32,128], index: 0, kind: input, shape index: {}]
  %s1 = inlined_call_operand.hbm [shape: bf16[128,128], index: 1, kind: input, shape index: {}]
  %s2 = inlined_call_operand.vmem [shape: f32[1,128], index: 2, kind: input, shape index: {}]
  %s3 = inlined_call_operand.hbm [shape: bf16[128,128], index: 3, kind: input, shape index: {}]
  %s4 = inlined_call_operand.vmem [shape: f32[1,128], index: 4, kind: input, shape index: {}]
  %s5 = inlined_call_operand.hbm [shape: f32[32,128], index: 5, kind: output, shape index: {}]
  %s6 = sld [smem:[#allocation0]]
  $region73: #{tpu_custom_call.1} parent=0
    _
  %s8 = ssub.s32 1, %s6
  %s9 = scalar_select 0, %s8, %s6
  $region1: #{tpu_custom_call.1} parent=0
    #allocation3 [shape = 'u8[8192]{0}', space=vmem, size = 0x2000, scoped, tag = 'input window, operand 0']
    #allocation4 [shape = 's32[2]{0}', space=sflag, size = 0x8, scoped, tag = 'scoped memory for tpu_custom_call.1']
    #allocation5 [shape = 's32[2]{0}', space=sflag, size = 0x8, scoped, tag = 'scoped memory for tpu_custom_call.1']
    #allocation6 [shape = 'u8[32768]{0}', space=vmem, size = 0x8000, scoped, tag = 'input window, operand 1, single buffered']
    #allocation7 [shape = 's32[1]{0}', space=sflag, size = 0x4, scoped, tag = 'scoped memory for tpu_custom_call.1']
    #allocation8 [shape = 'u8[32768]{0}', space=vmem, size = 0x8000, scoped, tag = 'input window, operand 3, single buffered']
    #allocation9 [shape = 'u8[16384]{0}', space=vmem, size = 0x4000, scoped, tag = 'output window, operand 0']
    %10 = vsyncpa [#allocation4], 0
    %s11 = scalar_lea.sflag [#allocation4], 1
    %12 = vsyncpa %s11, 0
    %13 = vsyncpa [#allocation7], 0
    %14 = vsyncpa [#allocation5], 0
    %s15 = scalar_lea.sflag [#allocation5], 1
    %16 = vsyncpa %s15, 0
    loop: start=0, step=1, limit=4
    $region2: #{tpu_custom_call.1} parent=1 // loop_pre_header
      _
    $region3: #{tpu_custom_call.1} parent=1 // loop_header
      %s18 = sphi 0, %s22
      %p19 = scmp.ge.s32.totalorder %s18, 4
      %s25 = sphi 0, %s37
      %s26 = sphi 0, %s33
      %s27 = sphi 0, %s25
      %s28 = sphi 0, %s26
      %s29 = sphi 0, %s27
      %s30 = sphi 0, %s28
      %s40 = sphi 0, %s42
      %s43 = sphi 0, %s40
      %s44 = sphi 0, %s43
      %s60 = sphi 0, %s44
      %s66 = sphi 0, %s68
      %s69 = sphi 0, %s66
      %s70 = sphi 0, %s69
      %s86 = sphi 0, %s70
      %s92 = sphi 0, %s94
      %s95 = sphi 0, %s92
      %s96 = sphi 0, %s95
      %s112 = sphi 0, %s96
      %s118 = sphi 0, %s120
      %s121 = sphi 0, %s118
      %s122 = sphi 0, %s121
      %s138 = sphi 0, %s122
      %s142 = sphi 0, %s142
      %s144 = sphi 0, %s142
      %s145 = sphi 0, %s144
      %s159 = sphi 0, %s145
      %s165 = sphi 0, %s167
      %s168 = sphi 0, %s165
      %s169 = sphi 0, %s168
      %s185 = sphi 0, %s169
    $region4: #{tpu_custom_call.1} parent=1 // loop_header_branch
      %21 = sbr.rel (%p19) target = $region8
    $region5: #{tpu_custom_call.1} parent=1 // loop_body
      %s23 = ssub.s32 %s18, 1
      %s24 = ssub.s32 %s18, 2
      %s31 = sadd.s32 1, %s26
      %p32 = scmp.ge.s32.totalorder %s31, 1
      %s33 = scalar_select %p32, 0, %s31
      %s34 = sadd.s32 1, %s25
      %s35 = scalar_select %p32, %s34, %s25
      %p36 = scmp.ge.s32.totalorder %s35, 2
      %s37 = scalar_select %p36, 0, %s35
      %s38 = ssub.s32 %s25, %s37
      %p39 = scmp.eq.s32.totalorder %s38, 0
      %s41 = sadd.s32 %s40, 1
      %s42 = scalar_select %p39, %s40, %s41
      %p45 = pneg %p39
      %p46 = scmp.eq.s32.totalorder %s18, 1
      %p47 = por %p45, %p46
      %p48 = scmp.ne.s32.totalorder %s40, %s43
      %p49 = scmp.eq.s32.totalorder %s18, 0
      %p50 = por %p48, %p49
      %p51 = scmp.ne.s32.totalorder %s40, %s43
      %p52 = scmp.eq.s32.totalorder %s23, 1
      %p53 = por %p51, %p52
      %p54 = scmp.ne.s32.totalorder %s43, %s44
      %p55 = scmp.eq.s32.totalorder %s23, 0
      %p56 = por %p54, %p55
      %p57 = scmp.ne.s32.totalorder %s43, %s44
      %p58 = scmp.eq.s32.totalorder %s24, 1
      %p59 = por %p57, %p58
      %p61 = scmp.ne.s32.totalorder %s44, %s60
      %p62 = scmp.eq.s32.totalorder %s24, 0
      %p63 = por %p61, %p62
      %s64 = ssub.s32 %s26, %s33
      %p65 = scmp.eq.s32.totalorder %s64, 0
      %s67 = sadd.s32 %s66, 1
      %s68 = scalar_select %p65, %s66, %s67
      %p71 = pneg %p65
      %p72 = scmp.eq.s32.totalorder %s18, 1
      %p73 = por %p71, %p72
      %p74 = scmp.ne.s32.totalorder %s66, %s69
      %p75 = scmp.eq.s32.totalorder %s18, 0
      %p76 = por %p74, %p75
      %p77 = scmp.ne.s32.totalorder %s66, %s69
      %p78 = scmp.eq.s32.totalorder %s23, 1
      %p79 = por %p77, %p78
      %p80 = scmp.ne.s32.totalorder %s69, %s70
      %p81 = scmp.eq.s32.totalorder %s23, 0
      %p82 = por %p80, %p81
      %p83 = scmp.ne.s32.totalorder %s69, %s70
      %p84 = scmp.eq.s32.totalorder %s24, 1
      %p85 = por %p83, %p84
      %p87 = scmp.ne.s32.totalorder %s70, %s86
      %p88 = scmp.eq.s32.totalorder %s24, 0
      %p89 = por %p87, %p88
      %s90 = ssub.s32 %s26, %s33
      %p91 = scmp.eq.s32.totalorder %s90, 0
      %s93 = sadd.s32 %s92, 1
      %s94 = scalar_select %p91, %s92, %s93
      %p97 = pneg %p91
      %p98 = scmp.eq.s32.totalorder %s18, 1
      %p99 = por %p97, %p98
      %p100 = scmp.ne.s32.totalorder %s92, %s95
      %p101 = scmp.eq.s32.totalorder %s18, 0
      %p102 = por %p100, %p101
      %p103 = scmp.ne.s32.totalorder %s92, %s95
      %p104 = scmp.eq.s32.totalorder %s23, 1
      %p105 = por %p103, %p104
      %p106 = scmp.ne.s32.totalorder %s95, %s96
      %p107 = scmp.eq.s32.totalorder %s23, 0
      %p108 = por %p106, %p107
      %p109 = scmp.ne.s32.totalorder %s95, %s96
      %p110 = scmp.eq.s32.totalorder %s24, 1
      %p111 = por %p109, %p110
      %p113 = scmp.ne.s32.totalorder %s96, %s112
      %p114 = scmp.eq.s32.totalorder %s24, 0
      %p115 = por %p113, %p114
      %s116 = ssub.s32 %s26, %s33
      %p117 = scmp.eq.s32.totalorder %s116, 0
      %s119 = sadd.s32 %s118, 1
      %s120 = scalar_select %p117, %s118, %s119
      %p123 = pneg %p117
      %p124 = scmp.eq.s32.totalorder %s18, 1
      %p125 = por %p123, %p124
      %p126 = scmp.ne.s32.totalorder %s118, %s121
      %p127 = scmp.eq.s32.totalorder %s18, 0
      %p128 = por %p126, %p127
      %p129 = scmp.ne.s32.totalorder %s118, %s121
      %p130 = scmp.eq.s32.totalorder %s23, 1
      %p131 = por %p129, %p130
      %p132 = scmp.ne.s32.totalorder %s121, %s122
      %p133 = scmp.eq.s32.totalorder %s23, 0
      %p134 = por %p132, %p133
      %p135 = scmp.ne.s32.totalorder %s121, %s122
      %p136 = scmp.eq.s32.totalorder %s24, 1
      %p137 = por %p135, %p136
      %p139 = scmp.ne.s32.totalorder %s122, %s138
      %p140 = scmp.eq.s32.totalorder %s24, 0
      %p141 = por %p139, %p140
      %s143 = sadd.s32 %s142, 1
      %p146 = scmp.eq.s32.totalorder %s18, 1
      %p147 = scmp.ne.s32.totalorder %s142, %s144
      %p148 = scmp.eq.s32.totalorder %s18, 0
      %p149 = por %p147, %p148
      %p150 = scmp.ne.s32.totalorder %s142, %s144
      %p151 = scmp.eq.s32.totalorder %s23, 1
      %p152 = por %p150, %p151
      %p153 = scmp.ne.s32.totalorder %s144, %s145
      %p154 = scmp.eq.s32.totalorder %s23, 0
      %p155 = por %p153, %p154
      %p156 = scmp.ne.s32.totalorder %s144, %s145
      %p157 = scmp.eq.s32.totalorder %s24, 1
      %p158 = por %p156, %p157
      %p160 = scmp.ne.s32.totalorder %s145, %s159
      %p161 = scmp.eq.s32.totalorder %s24, 0
      %p162 = por %p160, %p161
      %s163 = ssub.s32 %s25, %s37
      %p164 = scmp.eq.s32.totalorder %s163, 0
      %s166 = sadd.s32 %s165, 1
      %s167 = scalar_select %p164, %s165, %s166
      %p170 = pneg %p164
      %p171 = scmp.eq.s32.totalorder %s18, 1
      %p172 = por %p170, %p171
      %p173 = scmp.ne.s32.totalorder %s165, %s168
      %p174 = scmp.eq.s32.totalorder %s18, 0
      %p175 = por %p173, %p174
      %p176 = scmp.ne.s32.totalorder %s165, %s168
      %p177 = scmp.eq.s32.totalorder %s23, 1
      %p178 = por %p176, %p177
      %p179 = scmp.ne.s32.totalorder %s168, %s169
      %p180 = scmp.eq.s32.totalorder %s23, 0
      %p181 = por %p179, %p180
      %p182 = scmp.ne.s32.totalorder %s168, %s169
      %p183 = scmp.eq.s32.totalorder %s24, 1
      %p184 = por %p182, %p183
      %p186 = scmp.ne.s32.totalorder %s169, %s185
      %p187 = scmp.eq.s32.totalorder %s24, 0
      %p188 = por %p186, %p187
      %p189 = scmp.le.s32.totalorder 1, %s18
      %p190 = scmp.lt.s32.totalorder %s18, 3
      %p191 = pnand %p189, %p190
      %p192 = pneg %p191
      // Predicated region
      $region9: #{tpu_custom_call.1} parent=5 // pred_check
        _
      $region10: #{tpu_custom_call.1} parent=5 // pred_check_branch
        %194 = sbr.rel (%p191) target = $region12
      $region11: #{tpu_custom_call.1} parent=5 // pred_region
        %s195 = ssub.s32 %s18, 1
        // Predicated region
        $region13: #{tpu_custom_call.1} parent=11 // pred_check
          %p196 = pneg %p82
        $region14: #{tpu_custom_call.1} parent=11 // pred_check_branch
          %198 = sbr.rel (%p196) target = $region16
        $region15: #{tpu_custom_call.1} parent=11 // pred_region
          %200 = vsyncadd [#allocation7], 0
          %s201 = smul.addr %s28, 4
          %s202 = scalar_lea.hbm %s1, %s201
          %s203 = sshll.u32 %s202, 4
          %s204 = int_to_ptr.hbm [resolvable:$true] %s203
          %s205 = sshll.u32 [#allocation6], 4
          %s206 = int_to_ptr.vmem [resolvable:$true] %s205
          %211 = dma.hbm_to_vmem [thread:$0]  %s204, 1024, %s206, [#allocation7], 64, 64, 4
        $region16: #{tpu_custom_call.1} parent=11 // pred_fallthru
          _
        // Predicated region
        $region17: #{tpu_custom_call.1} parent=11 // pred_check
          %p212 = pneg %p108
        $region18: #{tpu_custom_call.1} parent=11 // pred_check_branch
          %214 = sbr.rel (%p212) target = $region20
        $region19: #{tpu_custom_call.1} parent=11 // pred_region
          %p215 = scmp.lt.s32.totalorder %s28, 0
          %s216 = scalar_select %p215, %s28, 0
          %s217 = scalar_lea.vmem %s2, %s216
        $region20: #{tpu_custom_call.1} parent=11 // pred_fallthru
          _
        // Predicated region
        $region21: #{tpu_custom_call.1} parent=11 // pred_check
          %p218 = pneg %p134
        $region22: #{tpu_custom_call.1} parent=11 // pred_check_branch
          %220 = sbr.rel (%p218) target = $region24
        $region23: #{tpu_custom_call.1} parent=11 // pred_region
          %s221 = smul.u32 16, %s28
          %223 = vsyncadd [#allocation7], 0
          %s224 = smul.addr %s221, 4
          %s225 = scalar_lea.hbm %s3, %s224
          %s226 = sshll.u32 %s225, 4
          %s227 = int_to_ptr.hbm [resolvable:$true] %s226
          %s228 = sshll.u32 [#allocation8], 4
          %s229 = int_to_ptr.vmem [resolvable:$true] %s228
          %234 = dma.hbm_to_vmem [thread:$0]  %s227, 1024, %s229, [#allocation7], 64, 64, 4
        $region24: #{tpu_custom_call.1} parent=11 // pred_fallthru
          _
        // Predicated region
        $region25: #{tpu_custom_call.1} parent=11 // pred_check
          %p235 = pneg %p155
        $region26: #{tpu_custom_call.1} parent=11 // pred_check_branch
          %237 = sbr.rel (%p235) target = $region28
        $region27: #{tpu_custom_call.1} parent=11 // pred_region
          _
        $region28: #{tpu_custom_call.1} parent=11 // pred_fallthru
          _
      $region12: #{tpu_custom_call.1} parent=5 // pred_fallthru
        _
      %p238 = scmp.lt.s32.totalorder %s18, 2
      // Predicated region
      $region29: #{tpu_custom_call.1} parent=5 // pred_check
        %p239 = pneg %p238
      $region30: #{tpu_custom_call.1} parent=5 // pred_check_branch
        %241 = sbr.rel (%p239) target = $region32
      $region31: #{tpu_custom_call.1} parent=5 // pred_region
        // Predicated region
        $region33: #{tpu_custom_call.1} parent=31 // pred_check
          %p242 = pneg %p50
        $region34: #{tpu_custom_call.1} parent=31 // pred_check_branch
          %244 = sbr.rel (%p242) target = $region36
        $region35: #{tpu_custom_call.1} parent=31 // pred_region
          %s245 = sand.u32 %s40, 1
          %s246 = scalar_lea.sflag [#allocation4], %s245
          %s247 = sand.u32 %s40, 1
          %s248 = smul.addr %s247, 8
          %s249 = scalar_lea.vmem [#allocation3], %s248
          %s250 = smul.u32 2, %s25
          %252 = vsyncadd %s246, 0
          %s253 = smul.addr %s250, 4
          %s254 = scalar_lea.hbm %s0, %s253
          %s255 = sshll.u32 %s254, 4
          %s256 = int_to_ptr.hbm [resolvable:$true] %s255
          %s257 = sshll.u32 %s249, 4
          %s258 = int_to_ptr.vmem [resolvable:$true] %s257
          %263 = dma.hbm_to_vmem [thread:$0]  %s256, 128, %s258, %s246, 64, 64, 4
        $region36: #{tpu_custom_call.1} parent=31 // pred_fallthru
          _
      $region32: #{tpu_custom_call.1} parent=5 // pred_fallthru
        _
      %p264 = scmp.le.s32.totalorder 1, %s18
      %p265 = scmp.lt.s32.totalorder %s18, 3
      %p266 = pnand %p264, %p265
      %p267 = pneg %p266
      // Predicated region
      $region37: #{tpu_custom_call.1} parent=5 // pred_check
        _
      $region38: #{tpu_custom_call.1} parent=5 // pred_check_branch
        %269 = sbr.rel (%p266) target = $region40
      $region39: #{tpu_custom_call.1} parent=5 // pred_region
        %s270 = ssub.s32 %s18, 1
        %s271 = sand.u32 %s43, 1
        %s272 = scalar_lea.sflag [#allocation4], %s271
        %s273 = sand.u32 %s43, 1
        %s274 = smul.addr %s273, 8
        %s275 = scalar_lea.vmem [#allocation3], %s274
        // Predicated region
        $region41: #{tpu_custom_call.1} parent=39 // pred_check
          %p276 = pneg %p56
        $region42: #{tpu_custom_call.1} parent=39 // pred_check_branch
          %278 = sbr.rel (%p276) target = $region44
        $region43: #{tpu_custom_call.1} parent=39 // pred_region
          %280 = dma.done %s272, 128
        $region44: #{tpu_custom_call.1} parent=39 // pred_fallthru
          _
        // Predicated region
        $region45: #{tpu_custom_call.1} parent=39 // pred_check
          %p281 = pneg %p82
        $region46: #{tpu_custom_call.1} parent=39 // pred_check_branch
          %283 = sbr.rel (%p281) target = $region48
        $region47: #{tpu_custom_call.1} parent=39 // pred_region
          %285 = dma.done [#allocation7], 1024
        $region48: #{tpu_custom_call.1} parent=39 // pred_fallthru
          _
        // Predicated region
        $region49: #{tpu_custom_call.1} parent=39 // pred_check
          %p286 = pneg %p134
        $region50: #{tpu_custom_call.1} parent=39 // pred_check_branch
          %288 = sbr.rel (%p286) target = $region52
        $region51: #{tpu_custom_call.1} parent=39 // pred_region
          %290 = dma.done [#allocation7], 1024
        $region52: #{tpu_custom_call.1} parent=39 // pred_fallthru
          _
        %s291 = sand.u32 %s43, 1
        %s292 = scalar_lea.sflag [#allocation4], %s291
        %s293 = sand.u32 %s43, 1
        %s294 = smul.addr %s293, 8
        %s295 = scalar_lea.vmem [#allocation3], %s294
        %p296 = pneg %p56
        %p297 = pneg %p53
        %p298 = pneg %p82
        %p299 = pneg %p79
        %p300 = scmp.lt.s32.totalorder %s28, 0
        %s301 = scalar_select %p300, %s28, 0
        %s302 = scalar_lea.vmem %s2, %s301
        %p303 = pneg %p108
        %p304 = pneg %p105
        %p305 = pneg %p134
        %p306 = pneg %p131
        %p307 = pneg %p155
        %p308 = pneg %p152
        %p309 = pneg %p181
        %p310 = pneg %p178
        %s311 = sand.u32 %s168, 1
        %s312 = scalar_lea.sflag [#allocation5], %s311
        %s313 = sand.u32 %s168, 1
        %s314 = smul.addr %s313, 16
        %s315 = scalar_lea.vmem [#allocation9], %s314
        %s316 = smul.u32 2, %s27
        %p317 = scmp.lt.s32.totalorder %s28, 0
        %s318 = scalar_select %p317, %s28, 0
        %s319 = scalar_lea.vmem %s2, %s318
        %s320 = smul.u32 16, %s28
        %s321 = smul.u32 2, %s27
        %p322 = scmp.eq.s32.totalorder %s28, 0
        // Predicated region
        $region53: #{tpu_custom_call.1} parent=39 // pred_check
          %p323 = pneg %p322
        $region54: #{tpu_custom_call.1} parent=39 // pred_check_branch
          %325 = sbr.rel (%p323) target = $region56
        $region55: #{tpu_custom_call.1} parent=39 // pred_region
          %326 = vst [vmem:[#allocation2] sm:$0xff] 0.0
          %327 = vst [vmem:[#allocation2 + $0x8] sm:$0xff] 0.0
        $region56: #{tpu_custom_call.1} parent=39 // pred_fallthru
          _
        %v328 = vld [vmem:[%s275] sm:$0xf]
        %v329 = vld [vmem:[%s275 + $0x4] sm:$0xf]
        %v330 = vld [vmem:[#allocation6] sm:$0xf]
        %v331 = vld [vmem:[#allocation6 + $0x4] sm:$0xf]
        %v332 = vld [vmem:[#allocation6 + $0x8] sm:$0xf]
        %v333 = vld [vmem:[#allocation6 + $0xc] sm:$0xf]
        %v334 = vld [vmem:[#allocation6 + $0x10] sm:$0xf]
        %v335 = vld [vmem:[#allocation6 + $0x14] sm:$0xf]
        %v336 = vld [vmem:[#allocation6 + $0x18] sm:$0xf]
        %v337 = vld [vmem:[#allocation6 + $0x1c] sm:$0xf]
        %v338 = vld [vmem:[#allocation6 + $0x20] sm:$0xf]
        %v339 = vld [vmem:[#allocation6 + $0x24] sm:$0xf]
        %v340 = vld [vmem:[#allocation6 + $0x28] sm:$0xf]
        %v341 = vld [vmem:[#allocation6 + $0x2c] sm:$0xf]
        %v342 = vld [vmem:[#allocation6 + $0x30] sm:$0xf]
        %v343 = vld [vmem:[#allocation6 + $0x34] sm:$0xf]
        %v344 = vld [vmem:[#allocation6 + $0x38] sm:$0xf]
        %v345 = vld [vmem:[#allocation6 + $0x3c] sm:$0xf]
        %v346 = vld [vmem:[%s319] sm:$0x1]
        %v348 = vperm.slane %v346, 0
        %v352 = vunpack.c.l.b16 %v328
        %v353 = vunpack.c.l.b16 %v329
        %v354 = vpack.c.b16 %v353, %v352
        %v372 = vunpack.c.l.b16 %v330
        %v373 = vunpack.c.l.b16 %v331
        %v374 = vunpack.c.l.b16 %v332
        %v375 = vunpack.c.l.b16 %v333
        %v376 = vunpack.c.l.b16 %v334
        %v377 = vunpack.c.l.b16 %v335
        %v378 = vunpack.c.l.b16 %v336
        %v379 = vunpack.c.l.b16 %v337
        %v380 = vunpack.c.l.b16 %v338
        %v381 = vunpack.c.l.b16 %v339
        %v382 = vunpack.c.l.b16 %v340
        %v383 = vunpack.c.l.b16 %v341
        %v384 = vunpack.c.l.b16 %v342
        %v385 = vunpack.c.l.b16 %v343
        %v386 = vunpack.c.l.b16 %v344
        %v387 = vunpack.c.l.b16 %v345
        %v388 = vpack.c.b16 %v373, %v372
        %v389 = vpack.c.b16 %v375, %v374
        %v390 = vpack.c.b16 %v377, %v376
        %v391 = vpack.c.b16 %v379, %v378
        %v392 = vpack.c.b16 %v381, %v380
        %v393 = vpack.c.b16 %v383, %v382
        %v394 = vpack.c.b16 %v385, %v384
        %v395 = vpack.c.b16 %v387, %v386
        %404 = vmatpush.bf16.msra.mxu0 %v395
        %405 = vmatpush.bf16.msra.mxu0 %v394
        %406 = vmatpush.bf16.msra.mxu0 %v393
        %407 = vmatpush.bf16.msra.mxu0 %v392
        %408 = vmatpush.bf16.msra.mxu0 %v391
        %409 = vmatpush.bf16.msra.mxu0 %v390
        %410 = vmatpush.bf16.msra.mxu0 %v389
        %411 = vmatpush.bf16.msra.mxu0 %v388
        %412 = vmatmul.bf16.gmra.mxu0 %v354
        %v413 = vpop.f32.mrf.mxu0
        %v414 = vadd.f32 %v348, %v413
        %v415 = vpop.f32.mrf.mxu0
        %v416 = vadd.f32 %v348, %v415
        %417 = vdwg.mxu0
        %v418 = vmax.f32 %v414, 0.0
        %v419 = vmax.f32 %v416, 0.0
        %v420 = vld [vmem:[#allocation2] sm:$0xff]
        %v421 = vld [vmem:[#allocation2 + $0x8] sm:$0xff]
        %v422 = vpack.c.bf16 %v419, %v418
        %v423 = vld [vmem:[#allocation8] sm:$0xf]
        %v424 = vld [vmem:[#allocation8 + $0x4] sm:$0xf]
        %v425 = vld [vmem:[#allocation8 + $0x8] sm:$0xf]
        %v426 = vld [vmem:[#allocation8 + $0xc] sm:$0xf]
        %v427 = vld [vmem:[#allocation8 + $0x10] sm:$0xf]
        %v428 = vld [vmem:[#allocation8 + $0x14] sm:$0xf]
        %v429 = vld [vmem:[#allocation8 + $0x18] sm:$0xf]
        %v430 = vld [vmem:[#allocation8 + $0x1c] sm:$0xf]
        %v431 = vld [vmem:[#allocation8 + $0x20] sm:$0xf]
        %v432 = vld [vmem:[#allocation8 + $0x24] sm:$0xf]
        %v433 = vld [vmem:[#allocation8 + $0x28] sm:$0xf]
        %v434 = vld [vmem:[#allocation8 + $0x2c] sm:$0xf]
        %v435 = vld [vmem:[#allocation8 + $0x30] sm:$0xf]
        %v436 = vld [vmem:[#allocation8 + $0x34] sm:$0xf]
        %v437 = vld [vmem:[#allocation8 + $0x38] sm:$0xf]
        %v438 = vld [vmem:[#allocation8 + $0x3c] sm:$0xf]
        %v455 = vunpack.c.l.b16 %v423
        %v456 = vunpack.c.l.b16 %v424
        %v457 = vunpack.c.l.b16 %v425
        %v458 = vunpack.c.l.b16 %v426
        %v459 = vunpack.c.l.b16 %v427
        %v460 = vunpack.c.l.b16 %v428
        %v461 = vunpack.c.l.b16 %v429
        %v462 = vunpack.c.l.b16 %v430
        %v463 = vunpack.c.l.b16 %v431
        %v464 = vunpack.c.l.b16 %v432
        %v465 = vunpack.c.l.b16 %v433
        %v466 = vunpack.c.l.b16 %v434
        %v467 = vunpack.c.l.b16 %v435
        %v468 = vunpack.c.l.b16 %v436
        %v469 = vunpack.c.l.b16 %v437
        %v470 = vunpack.c.l.b16 %v438
        %v471 = vpack.c.b16 %v456, %v455
        %v472 = vpack.c.b16 %v458, %v457
        %v473 = vpack.c.b16 %v460, %v459
        %v474 = vpack.c.b16 %v462, %v461
        %v475 = vpack.c.b16 %v464, %v463
        %v476 = vpack.c.b16 %v466, %v465
        %v477 = vpack.c.b16 %v468, %v467
        %v478 = vpack.c.b16 %v470, %v469
        %487 = vmatpush.bf16.msra.mxu0 %v478
        %488 = vmatpush.bf16.msra.mxu0 %v477
        %489 = vmatpush.bf16.msra.mxu0 %v476
        %490 = vmatpush.bf16.msra.mxu0 %v475
        %491 = vmatpush.bf16.msra.mxu0 %v474
        %492 = vmatpush.bf16.msra.mxu0 %v473
        %493 = vmatpush.bf16.msra.mxu0 %v472
        %494 = vmatpush.bf16.msra.mxu0 %v471
        %495 = vmatmul.bf16.gmra.mxu0 %v422
        %v496 = vpop.f32.mrf.mxu0
        %v497 = vadd.f32 0.0, %v496
        %v498 = vpop.f32.mrf.mxu0
        %v499 = vadd.f32 0.0, %v498
        %500 = vdwg.mxu0
        %v501 = vadd.f32 %v420, %v497
        %v502 = vadd.f32 %v421, %v499
        %503 = vst [vmem:[#allocation2] sm:$0xff] %v501
        %504 = vst [vmem:[#allocation2 + $0x8] sm:$0xff] %v502
        // Predicated region
        $region57: #{tpu_custom_call.1} parent=39 // pred_check
          %p505 = pneg %p322
        $region58: #{tpu_custom_call.1} parent=39 // pred_check_branch
          %507 = sbr.rel (%p505) target = $region60
        $region59: #{tpu_custom_call.1} parent=39 // pred_region
          %v508 = vld [vmem:[#allocation2] sm:$0xff]
          %v509 = vld [vmem:[#allocation2 + $0x8] sm:$0xff]
          %v510 = vld [vmem:[%s4] sm:$0x1]
          %v512 = vperm.slane %v510, 0
          %v514 = vadd.f32 %v508, %v512
          %v515 = vadd.f32 %v509, %v512
          %516 = vst [vmem:[%s315] sm:$0xff] %v514
          %517 = vst [vmem:[%s315 + $0x8] sm:$0xff] %v515
        $region60: #{tpu_custom_call.1} parent=39 // pred_fallthru
          _
        %s518 = sand.u32 %s168, 1
        %s519 = scalar_lea.sflag [#allocation5], %s518
        %s520 = sand.u32 %s168, 1
        %s521 = smul.addr %s520, 16
        %s522 = scalar_lea.vmem [#allocation9], %s521
        // Predicated region
        $region61: #{tpu_custom_call.1} parent=39 // pred_check
          %p523 = pneg %p178
        $region62: #{tpu_custom_call.1} parent=39 // pred_check_branch
          %525 = sbr.rel (%p523) target = $region64
        $region63: #{tpu_custom_call.1} parent=39 // pred_region
          %s526 = smul.u32 2, %s27
          %528 = vsyncadd %s519, 0
          %s529 = smul.addr %s526, 8
          %s530 = scalar_lea.hbm %s5, %s529
          %s531 = sshll.u32 %s522, 4
          %s532 = int_to_ptr.vmem [resolvable:$true] %s531
          %s533 = sshll.u32 %s530, 4
          %s534 = int_to_ptr.hbm [resolvable:$true] %s533
          %539 = dma.vmem_to_hbm [thread:$0]  %s532, 256, %s534, %s519, 128, 128, 8
        $region64: #{tpu_custom_call.1} parent=39 // pred_fallthru
          _
      $region40: #{tpu_custom_call.1} parent=5 // pred_fallthru
        _
      %p540 = scmp.le.s32.totalorder 2, %s18
      // Predicated region
      $region65: #{tpu_custom_call.1} parent=5 // pred_check
        %p541 = pneg %p540
      $region66: #{tpu_custom_call.1} parent=5 // pred_check_branch
        %543 = sbr.rel (%p541) target = $region68
      $region67: #{tpu_custom_call.1} parent=5 // pred_region
        %s544 = ssub.s32 %s18, 2
        // Predicated region
        $region69: #{tpu_custom_call.1} parent=67 // pred_check
          %p545 = pneg %p184
        $region70: #{tpu_custom_call.1} parent=67 // pred_check_branch
          %547 = sbr.rel (%p545) target = $region72
        $region71: #{tpu_custom_call.1} parent=67 // pred_region
          %s548 = sand.u32 %s169, 1
          %s549 = scalar_lea.sflag [#allocation5], %s548
          %s550 = sand.u32 %s169, 1
          %s551 = smul.addr %s550, 16
          %s552 = scalar_lea.vmem [#allocation9], %s551
          %554 = dma.done %s549, 256
        $region72: #{tpu_custom_call.1} parent=67 // pred_fallthru
          _
      $region68: #{tpu_custom_call.1} parent=5 // pred_fallthru
        _
    $region6: #{tpu_custom_call.1} parent=1 // loop_footer
      %s22 = sadd.s32 1, %s18
    $region7: #{tpu_custom_call.1} parent=1 // loop_footer_branch
      %17 = sbr.rel target = $region3
    $region8: #{tpu_custom_call.1} parent=1 // loop_exit
      _
    %555 = vsyncpa [#allocation4], 1
    %s556 = scalar_lea.sflag [#allocation4], 1
    %557 = vsyncpa %s556, 1
    %558 = vsyncpa [#allocation7], 1
    %559 = vsyncpa [#allocation5], 1
    %s560 = scalar_lea.sflag [#allocation5], 1
    %561 = vsyncpa %s560, 1

// kernel: tpu_custom_call.1
$region0: #{tpu_custom_call.1}
  #allocation0 [shape = 'u32[]', space=smem, size = 0x4, offset = 0x4, fixed_abs, tag = 'smem constant byte address 0x4 - core index']
  #allocation1 [shape = 'u32[72,128]{1,0:T(1,128)}', space=vmem, size = 0x9000, scoped, tag = 'internal scratch']
  #allocation2 [shape = 'f32[16,128]{1,0:T(8,128)}', space=vmem, size = 0x2000, scoped, tag = 'scratch operand']
  %s0 = inlined_call_operand.hbm [shape: bf16[32,128], index: 0, kind: input, shape index: {}]
  %s1 = inlined_call_operand.hbm [shape: bf16[128,128], index: 1, kind: input, shape index: {}]
  %s2 = inlined_call_operand.vmem [shape: f32[1,128], index: 2, kind: input, shape index: {}]
  %s3 = inlined_call_operand.hbm [shape: bf16[128,128], index: 3, kind: input, shape index: {}]
  %s4 = inlined_call_operand.vmem [shape: f32[1,128], index: 4, kind: input, shape index: {}]
  %s5 = inlined_call_operand.hbm [shape: f32[32,128], index: 5, kind: output, shape index: {}]
  %s6 = sld [smem:[#allocation0]]
  $region73: #{tpu_custom_call.1} parent=0
    _
  %s8 = ssub.s32 1, %s6
  %s9 = scalar_select 0, %s8, %s6
  $region1: #{tpu_custom_call.1} parent=0
    #allocation3 [shape = 'u8[8192]{0}', space=vmem, size = 0x2000, scoped, tag = 'input window, operand 0']
    #allocation4 [shape = 's32[2]{0}', space=sflag, size = 0x8, scoped, tag = 'scoped memory for tpu_custom_call.1']
    #allocation5 [shape = 's32[2]{0}', space=sflag, size = 0x8, scoped, tag = 'scoped memory for tpu_custom_call.1']
    #allocation6 [shape = 'u8[32768]{0}', space=vmem, size = 0x8000, scoped, tag = 'input window, operand 1, single buffered']
    #allocation7 [shape = 's32[1]{0}', space=sflag, size = 0x4, scoped, tag = 'scoped memory for tpu_custom_call.1']
    #allocation8 [shape = 'u8[32768]{0}', space=vmem, size = 0x8000, scoped, tag = 'input window, operand 3, single buffered']
    #allocation9 [shape = 'u8[16384]{0}', space=vmem, size = 0x4000, scoped, tag = 'output window, operand 0']
    %10 = vsyncpa [#allocation4], 0
    %s11 = scalar_lea.sflag [#allocation4], 1
    %12 = vsyncpa %s11, 0
    %13 = vsyncpa [#allocation7], 0
    %14 = vsyncpa [#allocation5], 0
    %s15 = scalar_lea.sflag [#allocation5], 1
    %16 = vsyncpa %s15, 0
    loop: start=0, step=1, limit=4
    $region2: #{tpu_custom_call.1} parent=1 // loop_pre_header
      _
    $region3: #{tpu_custom_call.1} parent=1 // loop_header
      %s18 = sphi 0, %s22
      %p19 = scmp.ge.s32.totalorder %s18, 4
      %s25 = sphi 0, %s37
      %s26 = sphi 0, %s33
      %s27 = sphi 0, %s25
      %s28 = sphi 0, %s26
      %s29 = sphi 0, %s27
      %s30 = sphi 0, %s28
      %s40 = sphi 0, %s42
      %s43 = sphi 0, %s40
      %s44 = sphi 0, %s43
      %s60 = sphi 0, %s44
      %s66 = sphi 0, %s68
      %s69 = sphi 0, %s66
      %s70 = sphi 0, %s69
      %s86 = sphi 0, %s70
      %s92 = sphi 0, %s94
      %s95 = sphi 0, %s92
      %s96 = sphi 0, %s95
      %s112 = sphi 0, %s96
      %s118 = sphi 0, %s120
      %s121 = sphi 0, %s118
      %s122 = sphi 0, %s121
      %s138 = sphi 0, %s122
      %s142 = sphi 0, %s142
      %s144 = sphi 0, %s142
      %s145 = sphi 0, %s144
      %s159 = sphi 0, %s145
      %s165 = sphi 0, %s167
      %s168 = sphi 0, %s165
      %s169 = sphi 0, %s168
      %s185 = sphi 0, %s169
    $region4: #{tpu_custom_call.1} parent=1 // loop_header_branch
      %21 = sbr.rel (%p19) target = $region8
    $region5: #{tpu_custom_call.1} parent=1 // loop_body
      %s23 = ssub.s32 %s18, 1
      %s24 = ssub.s32 %s18, 2
      %s31 = sadd.s32 1, %s26
      %p32 = scmp.ge.s32.totalorder %s31, 1
      %s33 = scalar_select %p32, 0, %s31
      %s34 = sadd.s32 1, %s25
      %s35 = scalar_select %p32, %s34, %s25
      %p36 = scmp.ge.s32.totalorder %s35, 2
      %s37 = scalar_select %p36, 0, %s35
      %s38 = ssub.s32 %s25, %s37
      %p39 = scmp.eq.s32.totalorder %s38, 0
      %s41 = sadd.s32 %s40, 1
      %s42 = scalar_select %p39, %s40, %s41
      %p45 = pneg %p39
      %p46 = scmp.eq.s32.totalorder %s18, 1
      %p47 = por %p45, %p46
      %p48 = scmp.ne.s32.totalorder %s40, %s43
      %p49 = scmp.eq.s32.totalorder %s18, 0
      %p50 = por %p48, %p49
      %p51 = scmp.ne.s32.totalorder %s40, %s43
      %p52 = scmp.eq.s32.totalorder %s23, 1
      %p53 = por %p51, %p52
      %p54 = scmp.ne.s32.totalorder %s43, %s44
      %p55 = scmp.eq.s32.totalorder %s23, 0
      %p56 = por %p54, %p55
      %p57 = scmp.ne.s32.totalorder %s43, %s44
      %p58 = scmp.eq.s32.totalorder %s24, 1
      %p59 = por %p57, %p58
      %p61 = scmp.ne.s32.totalorder %s44, %s60
      %p62 = scmp.eq.s32.totalorder %s24, 0
      %p63 = por %p61, %p62
      %s64 = ssub.s32 %s26, %s33
      %p65 = scmp.eq.s32.totalorder %s64, 0
      %s67 = sadd.s32 %s66, 1
      %s68 = scalar_select %p65, %s66, %s67
      %p71 = pneg %p65
      %p72 = scmp.eq.s32.totalorder %s18, 1
      %p73 = por %p71, %p72
      %p74 = scmp.ne.s32.totalorder %s66, %s69
      %p75 = scmp.eq.s32.totalorder %s18, 0
      %p76 = por %p74, %p75
      %p77 = scmp.ne.s32.totalorder %s66, %s69
      %p78 = scmp.eq.s32.totalorder %s23, 1
      %p79 = por %p77, %p78
      %p80 = scmp.ne.s32.totalorder %s69, %s70
      %p81 = scmp.eq.s32.totalorder %s23, 0
      %p82 = por %p80, %p81
      %p83 = scmp.ne.s32.totalorder %s69, %s70
      %p84 = scmp.eq.s32.totalorder %s24, 1
      %p85 = por %p83, %p84
      %p87 = scmp.ne.s32.totalorder %s70, %s86
      %p88 = scmp.eq.s32.totalorder %s24, 0
      %p89 = por %p87, %p88
      %s90 = ssub.s32 %s26, %s33
      %p91 = scmp.eq.s32.totalorder %s90, 0
      %s93 = sadd.s32 %s92, 1
      %s94 = scalar_select %p91, %s92, %s93
      %p97 = pneg %p91
      %p98 = scmp.eq.s32.totalorder %s18, 1
      %p99 = por %p97, %p98
      %p100 = scmp.ne.s32.totalorder %s92, %s95
      %p101 = scmp.eq.s32.totalorder %s18, 0
      %p102 = por %p100, %p101
      %p103 = scmp.ne.s32.totalorder %s92, %s95
      %p104 = scmp.eq.s32.totalorder %s23, 1
      %p105 = por %p103, %p104
      %p106 = scmp.ne.s32.totalorder %s95, %s96
      %p107 = scmp.eq.s32.totalorder %s23, 0
      %p108 = por %p106, %p107
      %p109 = scmp.ne.s32.totalorder %s95, %s96
      %p110 = scmp.eq.s32.totalorder %s24, 1
      %p111 = por %p109, %p110
      %p113 = scmp.ne.s32.totalorder %s96, %s112
      %p114 = scmp.eq.s32.totalorder %s24, 0
      %p115 = por %p113, %p114
      %s116 = ssub.s32 %s26, %s33
      %p117 = scmp.eq.s32.totalorder %s116, 0
      %s119 = sadd.s32 %s118, 1
      %s120 = scalar_select %p117, %s118, %s119
      %p123 = pneg %p117
      %p124 = scmp.eq.s32.totalorder %s18, 1
      %p125 = por %p123, %p124
      %p126 = scmp.ne.s32.totalorder %s118, %s121
      %p127 = scmp.eq.s32.totalorder %s18, 0
      %p128 = por %p126, %p127
      %p129 = scmp.ne.s32.totalorder %s118, %s121
      %p130 = scmp.eq.s32.totalorder %s23, 1
      %p131 = por %p129, %p130
      %p132 = scmp.ne.s32.totalorder %s121, %s122
      %p133 = scmp.eq.s32.totalorder %s23, 0
      %p134 = por %p132, %p133
      %p135 = scmp.ne.s32.totalorder %s121, %s122
      %p136 = scmp.eq.s32.totalorder %s24, 1
      %p137 = por %p135, %p136
      %p139 = scmp.ne.s32.totalorder %s122, %s138
      %p140 = scmp.eq.s32.totalorder %s24, 0
      %p141 = por %p139, %p140
      %s143 = sadd.s32 %s142, 1
      %p146 = scmp.eq.s32.totalorder %s18, 1
      %p147 = scmp.ne.s32.totalorder %s142, %s144
      %p148 = scmp.eq.s32.totalorder %s18, 0
      %p149 = por %p147, %p148
      %p150 = scmp.ne.s32.totalorder %s142, %s144
      %p151 = scmp.eq.s32.totalorder %s23, 1
      %p152 = por %p150, %p151
      %p153 = scmp.ne.s32.totalorder %s144, %s145
      %p154 = scmp.eq.s32.totalorder %s23, 0
      %p155 = por %p153, %p154
      %p156 = scmp.ne.s32.totalorder %s144, %s145
      %p157 = scmp.eq.s32.totalorder %s24, 1
      %p158 = por %p156, %p157
      %p160 = scmp.ne.s32.totalorder %s145, %s159
      %p161 = scmp.eq.s32.totalorder %s24, 0
      %p162 = por %p160, %p161
      %s163 = ssub.s32 %s25, %s37
      %p164 = scmp.eq.s32.totalorder %s163, 0
      %s166 = sadd.s32 %s165, 1
      %s167 = scalar_select %p164, %s165, %s166
      %p170 = pneg %p164
      %p171 = scmp.eq.s32.totalorder %s18, 1
      %p172 = por %p170, %p171
      %p173 = scmp.ne.s32.totalorder %s165, %s168
      %p174 = scmp.eq.s32.totalorder %s18, 0
      %p175 = por %p173, %p174
      %p176 = scmp.ne.s32.totalorder %s165, %s168
      %p177 = scmp.eq.s32.totalorder %s23, 1
      %p178 = por %p176, %p177
      %p179 = scmp.ne.s32.totalorder %s168, %s169
      %p180 = scmp.eq.s32.totalorder %s23, 0
      %p181 = por %p179, %p180
      %p182 = scmp.ne.s32.totalorder %s168, %s169
      %p183 = scmp.eq.s32.totalorder %s24, 1
      %p184 = por %p182, %p183
      %p186 = scmp.ne.s32.totalorder %s169, %s185
      %p187 = scmp.eq.s32.totalorder %s24, 0
      %p188 = por %p186, %p187
      %p189 = scmp.le.s32.totalorder 1, %s18
      %p190 = scmp.lt.s32.totalorder %s18, 3
      %p191 = pnand %p189, %p190
      %p192 = pneg %p191
      // Predicated region
      $region9: #{tpu_custom_call.1} parent=5 // pred_check
        _
      $region10: #{tpu_custom_call.1} parent=5 // pred_check_branch
        %194 = sbr.rel (%p191) target = $region12
      $region11: #{tpu_custom_call.1} parent=5 // pred_region
        %s195 = ssub.s32 %s18, 1
        // Predicated region
        $region13: #{tpu_custom_call.1} parent=11 // pred_check
          %p196 = pneg %p82
        $region14: #{tpu_custom_call.1} parent=11 // pred_check_branch
          %198 = sbr.rel (%p196) target = $region16
        $region15: #{tpu_custom_call.1} parent=11 // pred_region
          %200 = vsyncadd [#allocation7], 0
          %s201 = smul.addr %s28, 4
          %s202 = scalar_lea.hbm %s1, %s201
          %s203 = sshll.u32 %s202, 4
          %s204 = int_to_ptr.hbm [resolvable:$true] %s203
          %s205 = sshll.u32 [#allocation6], 4
          %s206 = int_to_ptr.vmem [resolvable:$true] %s205
          %211 = dma.hbm_to_vmem [thread:$0]  %s204, 1024, %s206, [#allocation7], 64, 64, 4
        $region16: #{tpu_custom_call.1} parent=11 // pred_fallthru
          _
        // Predicated region
        $region17: #{tpu_custom_call.1} parent=11 // pred_check
          %p212 = pneg %p108
        $region18: #{tpu_custom_call.1} parent=11 // pred_check_branch
          %214 = sbr.rel (%p212) target = $region20
        $region19: #{tpu_custom_call.1} parent=11 // pred_region
          %p215 = scmp.lt.s32.totalorder %s28, 0
          %s216 = scalar_select %p215, %s28, 0
          %s217 = scalar_lea.vmem %s2, %s216
        $region20: #{tpu_custom_call.1} parent=11 // pred_fallthru
          _
        // Predicated region
        $region21: #{tpu_custom_call.1} parent=11 // pred_check
          %p218 = pneg %p134
        $region22: #{tpu_custom_call.1} parent=11 // pred_check_branch
          %220 = sbr.rel (%p218) target = $region24
        $region23: #{tpu_custom_call.1} parent=11 // pred_region
          %s221 = smul.u32 16, %s28
          %223 = vsyncadd [#allocation7], 0
          %s224 = smul.addr %s221, 4
          %s225 = scalar_lea.hbm %s3, %s224
          %s226 = sshll.u32 %s225, 4
          %s227 = int_to_ptr.hbm [resolvable:$true] %s226
          %s228 = sshll.u32 [#allocation8], 4
          %s229 = int_to_ptr.vmem [resolvable:$true] %s228
          %234 = dma.hbm_to_vmem [thread:$0]  %s227, 1024, %s229, [#allocation7], 64, 64, 4
        $region24: #{tpu_custom_call.1} parent=11 // pred_fallthru
          _
        // Predicated region
        $region25: #{tpu_custom_call.1} parent=11 // pred_check
          %p235 = pneg %p155
        $region26: #{tpu_custom_call.1} parent=11 // pred_check_branch
          %237 = sbr.rel (%p235) target = $region28
        $region27: #{tpu_custom_call.1} parent=11 // pred_region
          _
        $region28: #{tpu_custom_call.1} parent=11 // pred_fallthru
          _
      $region12: #{tpu_custom_call.1} parent=5 // pred_fallthru
        _
      %p238 = scmp.lt.s32.totalorder %s18, 2
      // Predicated region
      $region29: #{tpu_custom_call.1} parent=5 // pred_check
        %p239 = pneg %p238
      $region30: #{tpu_custom_call.1} parent=5 // pred_check_branch
        %241 = sbr.rel (%p239) target = $region32
      $region31: #{tpu_custom_call.1} parent=5 // pred_region
        // Predicated region
        $region33: #{tpu_custom_call.1} parent=31 // pred_check
          %p242 = pneg %p50
        $region34: #{tpu_custom_call.1} parent=31 // pred_check_branch
          %244 = sbr.rel (%p242) target = $region36
        $region35: #{tpu_custom_call.1} parent=31 // pred_region
          %s245 = sand.u32 %s40, 1
          %s246 = scalar_lea.sflag [#allocation4], %s245
          %s247 = sand.u32 %s40, 1
          %s248 = smul.addr %s247, 8
          %s249 = scalar_lea.vmem [#allocation3], %s248
          %s250 = smul.u32 2, %s25
          %252 = vsyncadd %s246, 0
          %s253 = smul.addr %s250, 4
          %s254 = scalar_lea.hbm %s0, %s253
          %s255 = sshll.u32 %s254, 4
          %s256 = int_to_ptr.hbm [resolvable:$true] %s255
          %s257 = sshll.u32 %s249, 4
          %s258 = int_to_ptr.vmem [resolvable:$true] %s257
          %263 = dma.hbm_to_vmem [thread:$0]  %s256, 128, %s258, %s246, 64, 64, 4
        $region36: #{tpu_custom_call.1} parent=31 // pred_fallthru
          _
      $region32: #{tpu_custom_call.1} parent=5 // pred_fallthru
        _
      %p264 = scmp.le.s32.totalorder 1, %s18
      %p265 = scmp.lt.s32.totalorder %s18, 3
      %p266 = pnand %p264, %p265
      %p267 = pneg %p266
      // Predicated region
      $region37: #{tpu_custom_call.1} parent=5 // pred_check
        _
      $region38: #{tpu_custom_call.1} parent=5 // pred_check_branch
        %269 = sbr.rel (%p266) target = $region40
      $region39: #{tpu_custom_call.1} parent=5 // pred_region
        %s270 = ssub.s32 %s18, 1
        %s271 = sand.u32 %s43, 1
        %s272 = scalar_lea.sflag [#allocation4], %s271
        %s273 = sand.u32 %s43, 1
        %s274 = smul.addr %s273, 8
        %s275 = scalar_lea.vmem [#allocation3], %s274
        // Predicated region
        $region41: #{tpu_custom_call.1} parent=39 // pred_check
          %p276 = pneg %p56
        $region42: #{tpu_custom_call.1} parent=39 // pred_check_branch
          %278 = sbr.rel (%p276) target = $region44
        $region43: #{tpu_custom_call.1} parent=39 // pred_region
          %280 = dma.done %s272, 128
        $region44: #{tpu_custom_call.1} parent=39 // pred_fallthru
          _
        // Predicated region
        $region45: #{tpu_custom_call.1} parent=39 // pred_check
          %p281 = pneg %p82
        $region46: #{tpu_custom_call.1} parent=39 // pred_check_branch
          %283 = sbr.rel (%p281) target = $region48
        $region47: #{tpu_custom_call.1} parent=39 // pred_region
          %285 = dma.done [#allocation7], 1024
        $region48: #{tpu_custom_call.1} parent=39 // pred_fallthru
          _
        // Predicated region
        $region49: #{tpu_custom_call.1} parent=39 // pred_check
          %p286 = pneg %p134
        $region50: #{tpu_custom_call.1} parent=39 // pred_check_branch
          %288 = sbr.rel (%p286) target = $region52
        $region51: #{tpu_custom_call.1} parent=39 // pred_region
          %290 = dma.done [#allocation7], 1024
        $region52: #{tpu_custom_call.1} parent=39 // pred_fallthru
          _
        %s291 = sand.u32 %s43, 1
        %s292 = scalar_lea.sflag [#allocation4], %s291
        %s293 = sand.u32 %s43, 1
        %s294 = smul.addr %s293, 8
        %s295 = scalar_lea.vmem [#allocation3], %s294
        %p296 = pneg %p56
        %p297 = pneg %p53
        %p298 = pneg %p82
        %p299 = pneg %p79
        %p300 = scmp.lt.s32.totalorder %s28, 0
        %s301 = scalar_select %p300, %s28, 0
        %s302 = scalar_lea.vmem %s2, %s301
        %p303 = pneg %p108
        %p304 = pneg %p105
        %p305 = pneg %p134
        %p306 = pneg %p131
        %p307 = pneg %p155
        %p308 = pneg %p152
        %p309 = pneg %p181
        %p310 = pneg %p178
        %s311 = sand.u32 %s168, 1
        %s312 = scalar_lea.sflag [#allocation5], %s311
        %s313 = sand.u32 %s168, 1
        %s314 = smul.addr %s313, 16
        %s315 = scalar_lea.vmem [#allocation9], %s314
        %s316 = smul.u32 2, %s27
        %p317 = scmp.lt.s32.totalorder %s28, 0
        %s318 = scalar_select %p317, %s28, 0
        %s319 = scalar_lea.vmem %s2, %s318
        %s320 = smul.u32 16, %s28
        %s321 = smul.u32 2, %s27
        %p322 = scmp.eq.s32.totalorder %s28, 0
        // Predicated region
        $region53: #{tpu_custom_call.1} parent=39 // pred_check
          %p323 = pneg %p322
        $region54: #{tpu_custom_call.1} parent=39 // pred_check_branch
          %325 = sbr.rel (%p323) target = $region56
        $region55: #{tpu_custom_call.1} parent=39 // pred_region
          %326 = vst [vmem:[#allocation2] sm:$0xff] 0.0
          %327 = vst [vmem:[#allocation2 + $0x8] sm:$0xff] 0.0
        $region56: #{tpu_custom_call.1} parent=39 // pred_fallthru
          _
        %v328 = vld [vmem:[%s275] sm:$0xf]
        %v329 = vld [vmem:[%s275 + $0x4] sm:$0xf]
        %v330 = vld [vmem:[#allocation6] sm:$0xf]
        %v331 = vld [vmem:[#allocation6 + $0x4] sm:$0xf]
        %v332 = vld [vmem:[#allocation6 + $0x8] sm:$0xf]
        %v333 = vld [vmem:[#allocation6 + $0xc] sm:$0xf]
        %v334 = vld [vmem:[#allocation6 + $0x10] sm:$0xf]
        %v335 = vld [vmem:[#allocation6 + $0x14] sm:$0xf]
        %v336 = vld [vmem:[#allocation6 + $0x18] sm:$0xf]
        %v337 = vld [vmem:[#allocation6 + $0x1c] sm:$0xf]
        %v338 = vld [vmem:[#allocation6 + $0x20] sm:$0xf]
        %v339 = vld [vmem:[#allocation6 + $0x24] sm:$0xf]
        %v340 = vld [vmem:[#allocation6 + $0x28] sm:$0xf]
        %v341 = vld [vmem:[#allocation6 + $0x2c] sm:$0xf]
        %v342 = vld [vmem:[#allocation6 + $0x30] sm:$0xf]
        %v343 = vld [vmem:[#allocation6 + $0x34] sm:$0xf]
        %v344 = vld [vmem:[#allocation6 + $0x38] sm:$0xf]
        %v345 = vld [vmem:[#allocation6 + $0x3c] sm:$0xf]
        %v346 = vld [vmem:[%s319] sm:$0x1]
        %v348 = vperm.slane %v346, 0
        %v352 = vunpack.c.l.b16 %v328
        %v353 = vunpack.c.l.b16 %v329
        %v354 = vpack.c.b16 %v353, %v352
        %v372 = vunpack.c.l.b16 %v330
        %v373 = vunpack.c.l.b16 %v331
        %v374 = vunpack.c.l.b16 %v332
        %v375 = vunpack.c.l.b16 %v333
        %v376 = vunpack.c.l.b16 %v334
        %v377 = vunpack.c.l.b16 %v335
        %v378 = vunpack.c.l.b16 %v336
        %v379 = vunpack.c.l.b16 %v337
        %v380 = vunpack.c.l.b16 %v338
        %v381 = vunpack.c.l.b16 %v339
        %v382 = vunpack.c.l.b16 %v340
        %v383 = vunpack.c.l.b16 %v341
        %v384 = vunpack.c.l.b16 %v342
        %v385 = vunpack.c.l.b16 %v343
        %v386 = vunpack.c.l.b16 %v344
        %v387 = vunpack.c.l.b16 %v345
        %v388 = vpack.c.b16 %v373, %v372
        %v389 = vpack.c.b16 %v375, %v374
        %v390 = vpack.c.b16 %v377, %v376
        %v391 = vpack.c.b16 %v379, %v378
        %v392 = vpack.c.b16 %v381, %v380
        %v393 = vpack.c.b16 %v383, %v382
        %v394 = vpack.c.b16 %v385, %v384
        %v395 = vpack.c.b16 %v387, %v386
        %404 = vmatpush.bf16.msra.mxu0 %v395
        %405 = vmatpush.bf16.msra.mxu0 %v394
        %406 = vmatpush.bf16.msra.mxu0 %v393
        %407 = vmatpush.bf16.msra.mxu0 %v392
        %408 = vmatpush.bf16.msra.mxu0 %v391
        %409 = vmatpush.bf16.msra.mxu0 %v390
        %410 = vmatpush.bf16.msra.mxu0 %v389
        %411 = vmatpush.bf16.msra.mxu0 %v388
        %412 = vmatmul.bf16.gmra.mxu0 %v354
        %v413 = vpop.f32.mrf.mxu0
        %v414 = vadd.f32 %v348, %v413
        %v415 = vpop.f32.mrf.mxu0
        %v416 = vadd.f32 %v348, %v415
        %417 = vdwg.mxu0
        %v418 = vmax.f32 %v414, 0.0
        %v419 = vmax.f32 %v416, 0.0
        %v420 = vld [vmem:[#allocation2] sm:$0xff]
        %v421 = vld [vmem:[#allocation2 + $0x8] sm:$0xff]
        %v422 = vpack.c.bf16 %v419, %v418
        %v423 = vld [vmem:[#allocation8] sm:$0xf]
        %v424 = vld [vmem:[#allocation8 + $0x4] sm:$0xf]
        %v425 = vld [vmem:[#allocation8 + $0x8] sm:$0xf]
        %v426 = vld [vmem:[#allocation8 + $0xc] sm:$0xf]
        %v427 = vld [vmem:[#allocation8 + $0x10] sm:$0xf]
        %v428 = vld [vmem:[#allocation8 + $0x14] sm:$0xf]
        %v429 = vld [vmem:[#allocation8 + $0x18] sm:$0xf]
        %v430 = vld [vmem:[#allocation8 + $0x1c] sm:$0xf]
        %v431 = vld [vmem:[#allocation8 + $0x20] sm:$0xf]
        %v432 = vld [vmem:[#allocation8 + $0x24] sm:$0xf]
        %v433 = vld [vmem:[#allocation8 + $0x28] sm:$0xf]
        %v434 = vld [vmem:[#allocation8 + $0x2c] sm:$0xf]
        %v435 = vld [vmem:[#allocation8 + $0x30] sm:$0xf]
        %v436 = vld [vmem:[#allocation8 + $0x34] sm:$0xf]
        %v437 = vld [vmem:[#allocation8 + $0x38] sm:$0xf]
        %v438 = vld [vmem:[#allocation8 + $0x3c] sm:$0xf]
        %v455 = vunpack.c.l.b16 %v423
        %v456 = vunpack.c.l.b16 %v424
        %v457 = vunpack.c.l.b16 %v425
        %v458 = vunpack.c.l.b16 %v426
        %v459 = vunpack.c.l.b16 %v427
        %v460 = vunpack.c.l.b16 %v428
        %v461 = vunpack.c.l.b16 %v429
        %v462 = vunpack.c.l.b16 %v430
        %v463 = vunpack.c.l.b16 %v431
        %v464 = vunpack.c.l.b16 %v432
        %v465 = vunpack.c.l.b16 %v433
        %v466 = vunpack.c.l.b16 %v434
        %v467 = vunpack.c.l.b16 %v435
        %v468 = vunpack.c.l.b16 %v436
        %v469 = vunpack.c.l.b16 %v437
        %v470 = vunpack.c.l.b16 %v438
        %v471 = vpack.c.b16 %v456, %v455
        %v472 = vpack.c.b16 %v458, %v457
        %v473 = vpack.c.b16 %v460, %v459
        %v474 = vpack.c.b16 %v462, %v461
        %v475 = vpack.c.b16 %v464, %v463
        %v476 = vpack.c.b16 %v466, %v465
        %v477 = vpack.c.b16 %v468, %v467
        %v478 = vpack.c.b16 %v470, %v469
        %487 = vmatpush.bf16.msra.mxu0 %v478
        %488 = vmatpush.bf16.msra.mxu0 %v477
        %489 = vmatpush.bf16.msra.mxu0 %v476
        %490 = vmatpush.bf16.msra.mxu0 %v475
        %491 = vmatpush.bf16.msra.mxu0 %v474
        %492 = vmatpush.bf16.msra.mxu0 %v473
        %493 = vmatpush.bf16.msra.mxu0 %v472
        %494 = vmatpush.bf16.msra.mxu0 %v471
        %495 = vmatmul.bf16.gmra.mxu0 %v422
        %v496 = vpop.f32.mrf.mxu0
        %v497 = vadd.f32 0.0, %v496
        %v498 = vpop.f32.mrf.mxu0
        %v499 = vadd.f32 0.0, %v498
        %500 = vdwg.mxu0
        %v501 = vadd.f32 %v420, %v497
        %v502 = vadd.f32 %v421, %v499
        %503 = vst [vmem:[#allocation2] sm:$0xff] %v501
        %504 = vst [vmem:[#allocation2 + $0x8] sm:$0xff] %v502
        // Predicated region
        $region57: #{tpu_custom_call.1} parent=39 // pred_check
          %p505 = pneg %p322
        $region58: #{tpu_custom_call.1} parent=39 // pred_check_branch
          %507 = sbr.rel (%p505) target = $region60
        $region59: #{tpu_custom_call.1} parent=39 // pred_region
          %v508 = vld [vmem:[#allocation2] sm:$0xff]
          %v509 = vld [vmem:[#allocation2 + $0x8] sm:$0xff]
          %v510 = vld [vmem:[%s4] sm:$0x1]
          %v512 = vperm.slane %v510, 0
          %v514 = vadd.f32 %v508, %v512
          %v515 = vadd.f32 %v509, %v512
          %516 = vst [vmem:[%s315] sm:$0xff] %v514
          %517 = vst [vmem:[%s315 + $0x8] sm:$0xff] %v515
        $region60: #{tpu_custom_call.1} parent=39 // pred_fallthru
          _
        %s518 = sand.u32 %s168, 1
        %s519 = scalar_lea.sflag [#allocation5], %s518
        %s520 = sand.u32 %s168, 1
        %s521 = smul.addr %s520, 16
        %s522 = scalar_lea.vmem [#allocation9], %s521
        // Predicated region
        $region61: #{tpu_custom_call.1} parent=39 // pred_check
          %p523 = pneg %p178
        $region62: #{tpu_custom_call.1} parent=39 // pred_check_branch
          %525 = sbr.rel (%p523) target = $region64
        $region63: #{tpu_custom_call.1} parent=39 // pred_region
          %s526 = smul.u32 2, %s27
          %528 = vsyncadd %s519, 0
          %s529 = smul.addr %s526, 8
          %s530 = scalar_lea.hbm %s5, %s529
          %s531 = sshll.u32 %s522, 4
          %s532 = int_to_ptr.vmem [resolvable:$true] %s531
          %s533 = sshll.u32 %s530, 4
          %s534 = int_to_ptr.hbm [resolvable:$true] %s533
          %539 = dma.vmem_to_hbm [thread:$0]  %s532, 256, %s534, %s519, 128, 128, 8
        $region64: #{tpu_custom_call.1} parent=39 // pred_fallthru
          _
      $region40: #{tpu_custom_call.1} parent=5 // pred_fallthru
        _
      %p540 = scmp.le.s32.totalorder 2, %s18
      // Predicated region
      $region65: #{tpu_custom_call.1} parent=5 // pred_check
        %p541 = pneg %p540
      $region66: #{tpu_custom_call.1} parent=5 // pred_check_branch
        %543 = sbr.rel (%p541) target = $region68
      $region67: #{tpu_custom_call.1} parent=5 // pred_region
        %s544 = ssub.s32 %s18, 2
        // Predicated region
        $region69: #{tpu_custom_call.1} parent=67 // pred_check
          %p545 = pneg %p184
        $region70: #{tpu_custom_call.1} parent=67 // pred_check_branch
          %547 = sbr.rel (%p545) target = $region72
        $region71: #{tpu_custom_call.1} parent=67 // pred_region
          %s548 = sand.u32 %s169, 1
          %s549 = scalar_lea.sflag [#allocation5], %s548
          %s550 = sand.u32 %s169, 1
          %s551 = smul.addr %s550, 16
          %s552 = scalar_lea.vmem [#allocation9], %s551
          %554 = dma.done %s549, 256
        $region72: #{tpu_custom_call.1} parent=67 // pred_fallthru
          _
      $region68: #{tpu_custom_call.1} parent=5 // pred_fallthru
        _
    $region6: #{tpu_custom_call.1} parent=1 // loop_footer
      %s22 = sadd.s32 1, %s18
    $region7: #{tpu_custom_call.1} parent=1 // loop_footer_branch
      %17 = sbr.rel target = $region3
    $region8: #{tpu_custom_call.1} parent=1 // loop_exit
      _
    %555 = vsyncpa [#allocation4], 1
    %s556 = scalar_lea.sflag [#allocation4], 1
    %557 = vsyncpa %s556, 1
    %558 = vsyncpa [#allocation7], 1
    %559 = vsyncpa [#allocation5], 1
    %s560 = scalar_lea.sflag [#allocation5], 1
    %561 = vsyncpa %s560, 1

</llo_original>
